<compile_context>
chip_gen: v5e
topology: v5e:2x2
jax: 0.10.0
libtpu: 0.0.40
codegen_flags: <defaults>
</compile_context>

<pallas_src>
import jax
import jax.numpy as jnp
from jax.experimental import pallas as pl
from jax.experimental.pallas import tpu as pltpu

HP = 128  # padded per-gate lane width (>= hidden_size, multiple of 128)


def gru_fc_kernel(x_ref, pk_ref, whh_ref, fc_ref, out_ref):
    B, T, F = x_ref.shape
    hp = whh_ref.shape[0]                       # padded gate width (128)
    G = 3 * hp

    pk = pk_ref[...]                            # (F+2, 3*hp) packed input-side params
    wih = pk[0:F, :]                            # (F, 3*hp)  transposed input weights
    whh = whh_ref[...]                          # (hp, 3*hp) transposed hidden weights
    # Hoisted broadcasts (JAX does not CSE broadcast_in_dim inside the unroll).
    bgi = jnp.broadcast_to(pk[F:F + 1, :], (T, G))            # folded bias (r,z: b_ih+b_hh; n: b_in)
    bhn = jnp.broadcast_to(pk[F + 1:F + 2, 2 * hp:G], (B, hp))  # b_hn (stays inside r*(...))

    # Hoisted input projection: independent of h -> off the serial critical path.
    # One (T, F) @ (F, 3*hp) matmul per batch row (leading-dim ref indexing).
    gi_b = [jnp.dot(x_ref[b], wih, preferred_element_type=jnp.float32) + bgi
            for b in range(B)]                  # each (T, 3*hp)

    h = jnp.zeros((B, hp), jnp.float32)         # register-carried hidden state
    for t in range(T):                          # fully unrolled recurrence
        # Assemble this step's input projection rows (off-chain filler work).
        gi = jnp.concatenate([g[t:t + 1, :] for g in gi_b], axis=0)   # (B, 3*hp)
        # Hidden projection: the only matmul on the latency-critical chain.
        gh = jnp.dot(h, whh, preferred_element_type=jnp.float32)
        # 128-lane-aligned gate slices (r | z | n); sigmoid as a single tanh EUP op.
        r = 0.5 * jnp.tanh(0.5 * (gi[:, 0:hp] + gh[:, 0:hp])) + 0.5
        z = 0.5 * jnp.tanh(0.5 * (gi[:, hp:2 * hp] + gh[:, hp:2 * hp])) + 0.5
        n = jnp.tanh(gi[:, 2 * hp:G] + r * (gh[:, 2 * hp:G] + bhn))
        h = n + z * (h - n)                     # == (1-z)*n + z*h, shorter dep chain

    # Final fc on the last hidden state (weights + bias packed in one buffer).
    wfc = fc_ref[0:hp, :]                       # (hp, O)
    bfc = fc_ref[hp:hp + 1, :]                  # (1, O)
    out_ref[...] = (jnp.dot(h, wfc, preferred_element_type=jnp.float32)
                    + bfc).astype(out_ref.dtype)


@jax.jit
def gru_model_forward(x_btf, kernel_params):
    """x_btf: (B, T, F) float32, batch_first like PyTorch. Returns (B, O)."""
    packed_in, w_hh_p, packed_fc = kernel_params
    B, T, F = x_btf.shape
    O = packed_fc.shape[1]

    vmem = lambda: pl.BlockSpec(memory_space=pltpu.MemorySpace.VMEM)
    return pl.pallas_call(
        gru_fc_kernel,
        out_shape=jax.ShapeDtypeStruct((B, O), jnp.float32),
        in_specs=[vmem() for _ in range(4)],
        out_specs=vmem(),
    )(x_btf, packed_in, w_hh_p, packed_fc)


def init_pytorch_params(key, input_size=5, hidden_size=64, output_size=1):
    """PyTorch-layout parameters with nn.GRU/nn.Linear's U(-1/sqrt(H), 1/sqrt(H)) init."""
    H, F, O = hidden_size, input_size, output_size
    ks = jax.random.split(key, 6)
    s = 1.0 / jnp.sqrt(jnp.float32(H))
    u = lambda k, shp: jax.random.uniform(k, shp, jnp.float32, -s, s)
    w_ih = u(ks[0], (3 * H, F))    # weight_ih_l0, gate order [r | z | n]
    w_hh = u(ks[1], (3 * H, H))    # weight_hh_l0
    b_ih = u(ks[2], (3 * H,))
    b_hh = u(ks[3], (3 * H,))
    w_fc = u(ks[4], (O, H))        # fc.weight
    b_fc = u(ks[5], (O,))          # fc.bias
    return (w_ih, w_hh, b_ih, b_hh, w_fc, b_fc)


def prepare_kernel_params(pt_params, hp=HP):
    """Pre-transpose, zero-pad each gate to 128 lanes, fold biases, pack into 3 buffers."""
    w_ih, w_hh, b_ih, b_hh, w_fc, b_fc = pt_params
    H = w_hh.shape[1]
    F = w_ih.shape[1]
    assert hp >= H

    def split3(a):
        return a[0:H], a[H:2 * H], a[2 * H:3 * H]

    wir, wiz, win = split3(w_ih)
    whr, whz, whn = split3(w_hh)
    bir, biz, bin_ = split3(b_ih)
    bhr, bhz, bhn = split3(b_hh)

    padc = lambda m: jnp.pad(m, ((0, 0), (0, hp - H)))   # pad gate columns -> 128 lanes
    padv = lambda v: jnp.pad(v, (0, hp - H))

    # (F, 3*hp): transposed input weights, each gate zero-padded to 128 columns.
    w_ih_p = jnp.concatenate([padc(wir.T), padc(wiz.T), padc(win.T)], axis=1)
    # Folded bias added to the input projection: r,z get b_ih+b_hh; n keeps only
    # b_in (b_hn must remain inside r * (W_hn h + b_hn)).
    b_gi = jnp.concatenate([padv(bir + bhr), padv(biz + bhz), padv(bin_)])[None, :]
    # b_hn row, placed in the n-gate lane block (cols 2*hp:3*hp), zeros elsewhere.
    b_hn_row = jnp.concatenate([jnp.zeros((2 * hp,), jnp.float32), padv(bhn)])[None, :]
    packed_in = jnp.concatenate([w_ih_p, b_gi, b_hn_row], axis=0)        # (F+2, 3*hp)

    # (hp, 3*hp): transposed hidden weights, padded columns AND padded (zero) rows,
    # so padded lanes of h can never contaminate real lanes.
    w_hh_p = jnp.pad(
        jnp.concatenate([padc(whr.T), padc(whz.T), padc(whn.T)], axis=1),
        ((0, hp - H), (0, 0)))

    # (hp+1, O): fc weight (zero-padded rows) with the bias folded in as a last row.
    packed_fc = jnp.concatenate(
        [jnp.pad(w_fc.T, ((0, hp - H), (0, 0))), b_fc[None, :]], axis=0)

    return (packed_in, w_hh_p, packed_fc)


def reference_forward(x_btf, pt_params):
    """Pure-JAX GRU + fc reference (PyTorch semantics) for the sanity check."""
    w_ih, w_hh, b_ih, b_hh, w_fc, b_fc = pt_params
    B = x_btf.shape[0]
    H = w_hh.shape[1]

    def step(h, x_t):
        gi = x_t @ w_ih.T + b_ih
        gh = h @ w_hh.T + b_hh
        i_r, i_z, i_n = jnp.split(gi, 3, axis=-1)
        h_r, h_z, h_n = jnp.split(gh, 3, axis=-1)
        r = jax.nn.sigmoid(i_r + h_r)
        z = jax.nn.sigmoid(i_z + h_z)
        n = jnp.tanh(i_n + r * h_n)
        return (1.0 - z) * n + z * h, None

    h0 = jnp.zeros((B, H), jnp.float32)
    h_last, _ = jax.lax.scan(step, h0, jnp.transpose(x_btf, (1, 0, 2)))
    return h_last @ w_fc.T + b_fc


if __name__ == "__main__":
    key = jax.random.PRNGKey(0)
    k_param, k_x = jax.random.split(key)

    B, T, F, H, O = 2, 8, 5, 64, 1
    pt_params = init_pytorch_params(k_param, input_size=F, hidden_size=H,
                                    output_size=O)
    kernel_params = prepare_kernel_params(pt_params)
    x = jax.random.normal(k_x, (B, T, F), jnp.float32)

    out = jax.block_until_ready(gru_model_forward(x, kernel_params))
    ref = jax.block_until_ready(reference_forward(x, pt_params))

    assert out.shape == (B, O), out.shape
    # tanh-form sigmoid is mathematically identical; keep a slightly relaxed tol.
    assert jnp.allclose(out, ref, atol=1e-4, rtol=1e-4), (out, ref)

    print("KERNEL_OK")
</pallas_src>

<mosaic_0001>
module attributes {stable_mosaic.version = 11 : i64} {
  func.func @gru_fc_kernel(%arg0: memref<2x8x5xf32, #tpu.memory_space<vmem>>, %arg1: memref<7x384xf32, #tpu.memory_space<vmem>>, %arg2: memref<128x384xf32, #tpu.memory_space<vmem>>, %arg3: memref<129x1xf32, #tpu.memory_space<vmem>>, %arg4: memref<2x1xf32, #tpu.memory_space<vmem>>) attributes {dimension_semantics = [], scalar_prefetch = 0 : i64, scratch_operands = 0 : i64, tpu.core_type = #tpu.core_type<tc>} {
    %c0 = arith.constant 0 : index
    %c0_0 = arith.constant 0 : index
    %0 = vector.load %arg1[%c0, %c0_0] : memref<7x384xf32, #tpu.memory_space<vmem>>, vector<7x384xf32>
    %1 = vector.extract_strided_slice %0 {offsets = [0, 0], sizes = [5, 384], strides = [1, 1]} : vector<7x384xf32> to vector<5x384xf32>
    %c0_1 = arith.constant 0 : index
    %c0_2 = arith.constant 0 : index
    %2 = vector.load %arg2[%c0_1, %c0_2] : memref<128x384xf32, #tpu.memory_space<vmem>>, vector<128x384xf32>
    %3 = vector.extract_strided_slice %0 {offsets = [5, 0], sizes = [1, 384], strides = [1, 1]} : vector<7x384xf32> to vector<1x384xf32>
    %4 = vector.shape_cast %3 : vector<1x384xf32> to vector<1x384xf32>
    %5 = vector.broadcast %4 : vector<1x384xf32> to vector<8x384xf32>
    %6 = vector.extract_strided_slice %0 {offsets = [6, 256], sizes = [1, 128], strides = [1, 1]} : vector<7x384xf32> to vector<1x128xf32>
    %7 = vector.shape_cast %6 : vector<1x128xf32> to vector<1x128xf32>
    %8 = vector.broadcast %7 : vector<1x128xf32> to vector<2x128xf32>
    %c0_3 = arith.constant 0 : index
    %c0_4 = arith.constant 0 : index
    %c0_5 = arith.constant 0 : index
    %9 = vector.load %arg0[%c0_3, %c0_4, %c0_5] : memref<2x8x5xf32, #tpu.memory_space<vmem>>, vector<1x8x5xf32>
    %10 = vector.shape_cast %9 : vector<1x8x5xf32> to vector<8x5xf32>
    %cst = arith.constant dense<0.000000e+00> : vector<8x384xf32>
    %11 = tpu.matmul %10, %1, %cst {dimension_numbers = #tpu.dot_dimension_numbers<[1], [0], [0], [1], [0, 0, 1, 1], [], []>} : vector<8x5xf32>, vector<5x384xf32>, vector<8x384xf32> -> vector<8x384xf32>
    %12 = arith.addf %11, %5 : vector<8x384xf32>
    %c1 = arith.constant 1 : index
    %c0_6 = arith.constant 0 : index
    %c0_7 = arith.constant 0 : index
    %13 = vector.load %arg0[%c1, %c0_6, %c0_7] : memref<2x8x5xf32, #tpu.memory_space<vmem>>, vector<1x8x5xf32>
    %14 = vector.shape_cast %13 : vector<1x8x5xf32> to vector<8x5xf32>
    %cst_8 = arith.constant dense<0.000000e+00> : vector<8x384xf32>
    %15 = tpu.matmul %14, %1, %cst_8 {dimension_numbers = #tpu.dot_dimension_numbers<[1], [0], [0], [1], [0, 0, 1, 1], [], []>} : vector<8x5xf32>, vector<5x384xf32>, vector<8x384xf32> -> vector<8x384xf32>
    %16 = arith.addf %15, %5 : vector<8x384xf32>
    %cst_9 = arith.constant 0.000000e+00 : f32
    %17 = vector.broadcast %cst_9 : f32 to vector<2x128xf32>
    %18 = vector.extract_strided_slice %12 {offsets = [0, 0], sizes = [1, 384], strides = [1, 1]} : vector<8x384xf32> to vector<1x384xf32>
    %19 = vector.extract_strided_slice %16 {offsets = [0, 0], sizes = [1, 384], strides = [1, 1]} : vector<8x384xf32> to vector<1x384xf32>
    %20 = tpu.concatenate %18, %19 in 0 : vector<1x384xf32>, vector<1x384xf32> -> vector<2x384xf32>
    %cst_10 = arith.constant dense<0.000000e+00> : vector<2x384xf32>
    %21 = tpu.matmul %17, %2, %cst_10 {dimension_numbers = #tpu.dot_dimension_numbers<[1], [0], [0], [1], [0, 0, 1, 1], [], []>} : vector<2x128xf32>, vector<128x384xf32>, vector<2x384xf32> -> vector<2x384xf32>
    %22 = vector.extract_strided_slice %20 {offsets = [0, 0], sizes = [2, 128], strides = [1, 1]} : vector<2x384xf32> to vector<2x128xf32>
    %23 = vector.extract_strided_slice %21 {offsets = [0, 0], sizes = [2, 128], strides = [1, 1]} : vector<2x384xf32> to vector<2x128xf32>
    %24 = arith.addf %22, %23 : vector<2x128xf32>
    %cst_11 = arith.constant 5.000000e-01 : f32
    %25 = vector.broadcast %cst_11 : f32 to vector<2x128xf32>
    %26 = arith.mulf %25, %24 : vector<2x128xf32>
    %27 = math.tanh %26 : vector<2x128xf32>
    %cst_12 = arith.constant 5.000000e-01 : f32
    %28 = vector.broadcast %cst_12 : f32 to vector<2x128xf32>
    %29 = arith.mulf %28, %27 : vector<2x128xf32>
    %cst_13 = arith.constant 5.000000e-01 : f32
    %30 = vector.broadcast %cst_13 : f32 to vector<2x128xf32>
    %31 = arith.addf %29, %30 : vector<2x128xf32>
    %32 = vector.extract_strided_slice %20 {offsets = [0, 128], sizes = [2, 128], strides = [1, 1]} : vector<2x384xf32> to vector<2x128xf32>
    %33 = vector.extract_strided_slice %21 {offsets = [0, 128], sizes = [2, 128], strides = [1, 1]} : vector<2x384xf32> to vector<2x128xf32>
    %34 = arith.addf %32, %33 : vector<2x128xf32>
    %cst_14 = arith.constant 5.000000e-01 : f32
    %35 = vector.broadcast %cst_14 : f32 to vector<2x128xf32>
    %36 = arith.mulf %35, %34 : vector<2x128xf32>
    %37 = math.tanh %36 : vector<2x128xf32>
    %cst_15 = arith.constant 5.000000e-01 : f32
    %38 = vector.broadcast %cst_15 : f32 to vector<2x128xf32>
    %39 = arith.mulf %38, %37 : vector<2x128xf32>
    %cst_16 = arith.constant 5.000000e-01 : f32
    %40 = vector.broadcast %cst_16 : f32 to vector<2x128xf32>
    %41 = arith.addf %39, %40 : vector<2x128xf32>
    %42 = vector.extract_strided_slice %20 {offsets = [0, 256], sizes = [2, 128], strides = [1, 1]} : vector<2x384xf32> to vector<2x128xf32>
    %43 = vector.extract_strided_slice %21 {offsets = [0, 256], sizes = [2, 128], strides = [1, 1]} : vector<2x384xf32> to vector<2x128xf32>
    %44 = arith.addf %43, %8 : vector<2x128xf32>
    %45 = arith.mulf %31, %44 : vector<2x128xf32>
    %46 = arith.addf %42, %45 : vector<2x128xf32>
    %47 = math.tanh %46 : vector<2x128xf32>
    %48 = arith.subf %17, %47 : vector<2x128xf32>
    %49 = arith.mulf %41, %48 : vector<2x128xf32>
    %50 = arith.addf %47, %49 : vector<2x128xf32>
    %51 = vector.extract_strided_slice %12 {offsets = [1, 0], sizes = [1, 384], strides = [1, 1]} : vector<8x384xf32> to vector<1x384xf32>
    %52 = vector.extract_strided_slice %16 {offsets = [1, 0], sizes = [1, 384], strides = [1, 1]} : vector<8x384xf32> to vector<1x384xf32>
    %53 = tpu.concatenate %51, %52 in 0 : vector<1x384xf32>, vector<1x384xf32> -> vector<2x384xf32>
    %cst_17 = arith.constant dense<0.000000e+00> : vector<2x384xf32>
    %54 = tpu.matmul %50, %2, %cst_17 {dimension_numbers = #tpu.dot_dimension_numbers<[1], [0], [0], [1], [0, 0, 1, 1], [], []>} : vector<2x128xf32>, vector<128x384xf32>, vector<2x384xf32> -> vector<2x384xf32>
    %55 = vector.extract_strided_slice %53 {offsets = [0, 0], sizes = [2, 128], strides = [1, 1]} : vector<2x384xf32> to vector<2x128xf32>
    %56 = vector.extract_strided_slice %54 {offsets = [0, 0], sizes = [2, 128], strides = [1, 1]} : vector<2x384xf32> to vector<2x128xf32>
    %57 = arith.addf %55, %56 : vector<2x128xf32>
    %cst_18 = arith.constant 5.000000e-01 : f32
    %58 = vector.broadcast %cst_18 : f32 to vector<2x128xf32>
    %59 = arith.mulf %58, %57 : vector<2x128xf32>
    %60 = math.tanh %59 : vector<2x128xf32>
    %cst_19 = arith.constant 5.000000e-01 : f32
    %61 = vector.broadcast %cst_19 : f32 to vector<2x128xf32>
    %62 = arith.mulf %61, %60 : vector<2x128xf32>
    %cst_20 = arith.constant 5.000000e-01 : f32
    %63 = vector.broadcast %cst_20 : f32 to vector<2x128xf32>
    %64 = arith.addf %62, %63 : vector<2x128xf32>
    %65 = vector.extract_strided_slice %53 {offsets = [0, 128], sizes = [2, 128], strides = [1, 1]} : vector<2x384xf32> to vector<2x128xf32>
    %66 = vector.extract_strided_slice %54 {offsets = [0, 128], sizes = [2, 128], strides = [1, 1]} : vector<2x384xf32> to vector<2x128xf32>
    %67 = arith.addf %65, %66 : vector<2x128xf32>
    %cst_21 = arith.constant 5.000000e-01 : f32
    %68 = vector.broadcast %cst_21 : f32 to vector<2x128xf32>
    %69 = arith.mulf %68, %67 : vector<2x128xf32>
    %70 = math.tanh %69 : vector<2x128xf32>
    %cst_22 = arith.constant 5.000000e-01 : f32
    %71 = vector.broadcast %cst_22 : f32 to vector<2x128xf32>
    %72 = arith.mulf %71, %70 : vector<2x128xf32>
    %cst_23 = arith.constant 5.000000e-01 : f32
    %73 = vector.broadcast %cst_23 : f32 to vector<2x128xf32>
    %74 = arith.addf %72, %73 : vector<2x128xf32>
    %75 = vector.extract_strided_slice %53 {offsets = [0, 256], sizes = [2, 128], strides = [1, 1]} : vector<2x384xf32> to vector<2x128xf32>
    %76 = vector.extract_strided_slice %54 {offsets = [0, 256], sizes = [2, 128], strides = [1, 1]} : vector<2x384xf32> to vector<2x128xf32>
    %77 = arith.addf %76, %8 : vector<2x128xf32>
    %78 = arith.mulf %64, %77 : vector<2x128xf32>
    %79 = arith.addf %75, %78 : vector<2x128xf32>
    %80 = math.tanh %79 : vector<2x128xf32>
    %81 = arith.subf %50, %80 : vector<2x128xf32>
    %82 = arith.mulf %74, %81 : vector<2x128xf32>
    %83 = arith.addf %80, %82 : vector<2x128xf32>
    %84 = vector.extract_strided_slice %12 {offsets = [2, 0], sizes = [1, 384], strides = [1, 1]} : vector<8x384xf32> to vector<1x384xf32>
    %85 = vector.extract_strided_slice %16 {offsets = [2, 0], sizes = [1, 384], strides = [1, 1]} : vector<8x384xf32> to vector<1x384xf32>
    %86 = tpu.concatenate %84, %85 in 0 : vector<1x384xf32>, vector<1x384xf32> -> vector<2x384xf32>
    %cst_24 = arith.constant dense<0.000000e+00> : vector<2x384xf32>
    %87 = tpu.matmul %83, %2, %cst_24 {dimension_numbers = #tpu.dot_dimension_numbers<[1], [0], [0], [1], [0, 0, 1, 1], [], []>} : vector<2x128xf32>, vector<128x384xf32>, vector<2x384xf32> -> vector<2x384xf32>
    %88 = vector.extract_strided_slice %86 {offsets = [0, 0], sizes = [2, 128], strides = [1, 1]} : vector<2x384xf32> to vector<2x128xf32>
    %89 = vector.extract_strided_slice %87 {offsets = [0, 0], sizes = [2, 128], strides = [1, 1]} : vector<2x384xf32> to vector<2x128xf32>
    %90 = arith.addf %88, %89 : vector<2x128xf32>
    %cst_25 = arith.constant 5.000000e-01 : f32
    %91 = vector.broadcast %cst_25 : f32 to vector<2x128xf32>
    %92 = arith.mulf %91, %90 : vector<2x128xf32>
    %93 = math.tanh %92 : vector<2x128xf32>
    %cst_26 = arith.constant 5.000000e-01 : f32
    %94 = vector.broadcast %cst_26 : f32 to vector<2x128xf32>
    %95 = arith.mulf %94, %93 : vector<2x128xf32>
    %cst_27 = arith.constant 5.000000e-01 : f32
    %96 = vector.broadcast %cst_27 : f32 to vector<2x128xf32>
    %97 = arith.addf %95, %96 : vector<2x128xf32>
    %98 = vector.extract_strided_slice %86 {offsets = [0, 128], sizes = [2, 128], strides = [1, 1]} : vector<2x384xf32> to vector<2x128xf32>
    %99 = vector.extract_strided_slice %87 {offsets = [0, 128], sizes = [2, 128], strides = [1, 1]} : vector<2x384xf32> to vector<2x128xf32>
    %100 = arith.addf %98, %99 : vector<2x128xf32>
    %cst_28 = arith.constant 5.000000e-01 : f32
    %101 = vector.broadcast %cst_28 : f32 to vector<2x128xf32>
    %102 = arith.mulf %101, %100 : vector<2x128xf32>
    %103 = math.tanh %102 : vector<2x128xf32>
    %cst_29 = arith.constant 5.000000e-01 : f32
    %104 = vector.broadcast %cst_29 : f32 to vector<2x128xf32>
    %105 = arith.mulf %104, %103 : vector<2x128xf32>
    %cst_30 = arith.constant 5.000000e-01 : f32
    %106 = vector.broadcast %cst_30 : f32 to vector<2x128xf32>
    %107 = arith.addf %105, %106 : vector<2x128xf32>
    %108 = vector.extract_strided_slice %86 {offsets = [0, 256], sizes = [2, 128], strides = [1, 1]} : vector<2x384xf32> to vector<2x128xf32>
    %109 = vector.extract_strided_slice %87 {offsets = [0, 256], sizes = [2, 128], strides = [1, 1]} : vector<2x384xf32> to vector<2x128xf32>
    %110 = arith.addf %109, %8 : vector<2x128xf32>
    %111 = arith.mulf %97, %110 : vector<2x128xf32>
    %112 = arith.addf %108, %111 : vector<2x128xf32>
    %113 = math.tanh %112 : vector<2x128xf32>
    %114 = arith.subf %83, %113 : vector<2x128xf32>
    %115 = arith.mulf %107, %114 : vector<2x128xf32>
    %116 = arith.addf %113, %115 : vector<2x128xf32>
    %117 = vector.extract_strided_slice %12 {offsets = [3, 0], sizes = [1, 384], strides = [1, 1]} : vector<8x384xf32> to vector<1x384xf32>
    %118 = vector.extract_strided_slice %16 {offsets = [3, 0], sizes = [1, 384], strides = [1, 1]} : vector<8x384xf32> to vector<1x384xf32>
    %119 = tpu.concatenate %117, %118 in 0 : vector<1x384xf32>, vector<1x384xf32> -> vector<2x384xf32>
    %cst_31 = arith.constant dense<0.000000e+00> : vector<2x384xf32>
    %120 = tpu.matmul %116, %2, %cst_31 {dimension_numbers = #tpu.dot_dimension_numbers<[1], [0], [0], [1], [0, 0, 1, 1], [], []>} : vector<2x128xf32>, vector<128x384xf32>, vector<2x384xf32> -> vector<2x384xf32>
    %121 = vector.extract_strided_slice %119 {offsets = [0, 0], sizes = [2, 128], strides = [1, 1]} : vector<2x384xf32> to vector<2x128xf32>
    %122 = vector.extract_strided_slice %120 {offsets = [0, 0], sizes = [2, 128], strides = [1, 1]} : vector<2x384xf32> to vector<2x128xf32>
    %123 = arith.addf %121, %122 : vector<2x128xf32>
    %cst_32 = arith.constant 5.000000e-01 : f32
    %124 = vector.broadcast %cst_32 : f32 to vector<2x128xf32>
    %125 = arith.mulf %124, %123 : vector<2x128xf32>
    %126 = math.tanh %125 : vector<2x128xf32>
    %cst_33 = arith.constant 5.000000e-01 : f32
    %127 = vector.broadcast %cst_33 : f32 to vector<2x128xf32>
    %128 = arith.mulf %127, %126 : vector<2x128xf32>
    %cst_34 = arith.constant 5.000000e-01 : f32
    %129 = vector.broadcast %cst_34 : f32 to vector<2x128xf32>
    %130 = arith.addf %128, %129 : vector<2x128xf32>
    %131 = vector.extract_strided_slice %119 {offsets = [0, 128], sizes = [2, 128], strides = [1, 1]} : vector<2x384xf32> to vector<2x128xf32>
    %132 = vector.extract_strided_slice %120 {offsets = [0, 128], sizes = [2, 128], strides = [1, 1]} : vector<2x384xf32> to vector<2x128xf32>
    %133 = arith.addf %131, %132 : vector<2x128xf32>
    %cst_35 = arith.constant 5.000000e-01 : f32
    %134 = vector.broadcast %cst_35 : f32 to vector<2x128xf32>
    %135 = arith.mulf %134, %133 : vector<2x128xf32>
    %136 = math.tanh %135 : vector<2x128xf32>
    %cst_36 = arith.constant 5.000000e-01 : f32
    %137 = vector.broadcast %cst_36 : f32 to vector<2x128xf32>
    %138 = arith.mulf %137, %136 : vector<2x128xf32>
    %cst_37 = arith.constant 5.000000e-01 : f32
    %139 = vector.broadcast %cst_37 : f32 to vector<2x128xf32>
    %140 = arith.addf %138, %139 : vector<2x128xf32>
    %141 = vector.extract_strided_slice %119 {offsets = [0, 256], sizes = [2, 128], strides = [1, 1]} : vector<2x384xf32> to vector<2x128xf32>
    %142 = vector.extract_strided_slice %120 {offsets = [0, 256], sizes = [2, 128], strides = [1, 1]} : vector<2x384xf32> to vector<2x128xf32>
    %143 = arith.addf %142, %8 : vector<2x128xf32>
    %144 = arith.mulf %130, %143 : vector<2x128xf32>
    %145 = arith.addf %141, %144 : vector<2x128xf32>
    %146 = math.tanh %145 : vector<2x128xf32>
    %147 = arith.subf %116, %146 : vector<2x128xf32>
    %148 = arith.mulf %140, %147 : vector<2x128xf32>
    %149 = arith.addf %146, %148 : vector<2x128xf32>
    %150 = vector.extract_strided_slice %12 {offsets = [4, 0], sizes = [1, 384], strides = [1, 1]} : vector<8x384xf32> to vector<1x384xf32>
    %151 = vector.extract_strided_slice %16 {offsets = [4, 0], sizes = [1, 384], strides = [1, 1]} : vector<8x384xf32> to vector<1x384xf32>
    %152 = tpu.concatenate %150, %151 in 0 : vector<1x384xf32>, vector<1x384xf32> -> vector<2x384xf32>
    %cst_38 = arith.constant dense<0.000000e+00> : vector<2x384xf32>
    %153 = tpu.matmul %149, %2, %cst_38 {dimension_numbers = #tpu.dot_dimension_numbers<[1], [0], [0], [1], [0, 0, 1, 1], [], []>} : vector<2x128xf32>, vector<128x384xf32>, vector<2x384xf32> -> vector<2x384xf32>
    %154 = vector.extract_strided_slice %152 {offsets = [0, 0], sizes = [2, 128], strides = [1, 1]} : vector<2x384xf32> to vector<2x128xf32>
    %155 = vector.extract_strided_slice %153 {offsets = [0, 0], sizes = [2, 128], strides = [1, 1]} : vector<2x384xf32> to vector<2x128xf32>
    %156 = arith.addf %154, %155 : vector<2x128xf32>
    %cst_39 = arith.constant 5.000000e-01 : f32
    %157 = vector.broadcast %cst_39 : f32 to vector<2x128xf32>
    %158 = arith.mulf %157, %156 : vector<2x128xf32>
    %159 = math.tanh %158 : vector<2x128xf32>
    %cst_40 = arith.constant 5.000000e-01 : f32
    %160 = vector.broadcast %cst_40 : f32 to vector<2x128xf32>
    %161 = arith.mulf %160, %159 : vector<2x128xf32>
    %cst_41 = arith.constant 5.000000e-01 : f32
    %162 = vector.broadcast %cst_41 : f32 to vector<2x128xf32>
    %163 = arith.addf %161, %162 : vector<2x128xf32>
    %164 = vector.extract_strided_slice %152 {offsets = [0, 128], sizes = [2, 128], strides = [1, 1]} : vector<2x384xf32> to vector<2x128xf32>
    %165 = vector.extract_strided_slice %153 {offsets = [0, 128], sizes = [2, 128], strides = [1, 1]} : vector<2x384xf32> to vector<2x128xf32>
    %166 = arith.addf %164, %165 : vector<2x128xf32>
    %cst_42 = arith.constant 5.000000e-01 : f32
    %167 = vector.broadcast %cst_42 : f32 to vector<2x128xf32>
    %168 = arith.mulf %167, %166 : vector<2x128xf32>
    %169 = math.tanh %168 : vector<2x128xf32>
    %cst_43 = arith.constant 5.000000e-01 : f32
    %170 = vector.broadcast %cst_43 : f32 to vector<2x128xf32>
    %171 = arith.mulf %170, %169 : vector<2x128xf32>
    %cst_44 = arith.constant 5.000000e-01 : f32
    %172 = vector.broadcast %cst_44 : f32 to vector<2x128xf32>
    %173 = arith.addf %171, %172 : vector<2x128xf32>
    %174 = vector.extract_strided_slice %152 {offsets = [0, 256], sizes = [2, 128], strides = [1, 1]} : vector<2x384xf32> to vector<2x128xf32>
    %175 = vector.extract_strided_slice %153 {offsets = [0, 256], sizes = [2, 128], strides = [1, 1]} : vector<2x384xf32> to vector<2x128xf32>
    %176 = arith.addf %175, %8 : vector<2x128xf32>
    %177 = arith.mulf %163, %176 : vector<2x128xf32>
    %178 = arith.addf %174, %177 : vector<2x128xf32>
    %179 = math.tanh %178 : vector<2x128xf32>
    %180 = arith.subf %149, %179 : vector<2x128xf32>
    %181 = arith.mulf %173, %180 : vector<2x128xf32>
    %182 = arith.addf %179, %181 : vector<2x128xf32>
    %183 = vector.extract_strided_slice %12 {offsets = [5, 0], sizes = [1, 384], strides = [1, 1]} : vector<8x384xf32> to vector<1x384xf32>
    %184 = vector.extract_strided_slice %16 {offsets = [5, 0], sizes = [1, 384], strides = [1, 1]} : vector<8x384xf32> to vector<1x384xf32>
    %185 = tpu.concatenate %183, %184 in 0 : vector<1x384xf32>, vector<1x384xf32> -> vector<2x384xf32>
    %cst_45 = arith.constant dense<0.000000e+00> : vector<2x384xf32>
    %186 = tpu.matmul %182, %2, %cst_45 {dimension_numbers = #tpu.dot_dimension_numbers<[1], [0], [0], [1], [0, 0, 1, 1], [], []>} : vector<2x128xf32>, vector<128x384xf32>, vector<2x384xf32> -> vector<2x384xf32>
    %187 = vector.extract_strided_slice %185 {offsets = [0, 0], sizes = [2, 128], strides = [1, 1]} : vector<2x384xf32> to vector<2x128xf32>
    %188 = vector.extract_strided_slice %186 {offsets = [0, 0], sizes = [2, 128], strides = [1, 1]} : vector<2x384xf32> to vector<2x128xf32>
    %189 = arith.addf %187, %188 : vector<2x128xf32>
    %cst_46 = arith.constant 5.000000e-01 : f32
    %190 = vector.broadcast %cst_46 : f32 to vector<2x128xf32>
    %191 = arith.mulf %190, %189 : vector<2x128xf32>
    %192 = math.tanh %191 : vector<2x128xf32>
    %cst_47 = arith.constant 5.000000e-01 : f32
    %193 = vector.broadcast %cst_47 : f32 to vector<2x128xf32>
    %194 = arith.mulf %193, %192 : vector<2x128xf32>
    %cst_48 = arith.constant 5.000000e-01 : f32
    %195 = vector.broadcast %cst_48 : f32 to vector<2x128xf32>
    %196 = arith.addf %194, %195 : vector<2x128xf32>
    %197 = vector.extract_strided_slice %185 {offsets = [0, 128], sizes = [2, 128], strides = [1, 1]} : vector<2x384xf32> to vector<2x128xf32>
    %198 = vector.extract_strided_slice %186 {offsets = [0, 128], sizes = [2, 128], strides = [1, 1]} : vector<2x384xf32> to vector<2x128xf32>
    %199 = arith.addf %197, %198 : vector<2x128xf32>
    %cst_49 = arith.constant 5.000000e-01 : f32
    %200 = vector.broadcast %cst_49 : f32 to vector<2x128xf32>
    %201 = arith.mulf %200, %199 : vector<2x128xf32>
    %202 = math.tanh %201 : vector<2x128xf32>
    %cst_50 = arith.constant 5.000000e-01 : f32
    %203 = vector.broadcast %cst_50 : f32 to vector<2x128xf32>
    %204 = arith.mulf %203, %202 : vector<2x128xf32>
    %cst_51 = arith.constant 5.000000e-01 : f32
    %205 = vector.broadcast %cst_51 : f32 to vector<2x128xf32>
    %206 = arith.addf %204, %205 : vector<2x128xf32>
    %207 = vector.extract_strided_slice %185 {offsets = [0, 256], sizes = [2, 128], strides = [1, 1]} : vector<2x384xf32> to vector<2x128xf32>
    %208 = vector.extract_strided_slice %186 {offsets = [0, 256], sizes = [2, 128], strides = [1, 1]} : vector<2x384xf32> to vector<2x128xf32>
    %209 = arith.addf %208, %8 : vector<2x128xf32>
    %210 = arith.mulf %196, %209 : vector<2x128xf32>
    %211 = arith.addf %207, %210 : vector<2x128xf32>
    %212 = math.tanh %211 : vector<2x128xf32>
    %213 = arith.subf %182, %212 : vector<2x128xf32>
    %214 = arith.mulf %206, %213 : vector<2x128xf32>
    %215 = arith.addf %212, %214 : vector<2x128xf32>
    %216 = vector.extract_strided_slice %12 {offsets = [6, 0], sizes = [1, 384], strides = [1, 1]} : vector<8x384xf32> to vector<1x384xf32>
    %217 = vector.extract_strided_slice %16 {offsets = [6, 0], sizes = [1, 384], strides = [1, 1]} : vector<8x384xf32> to vector<1x384xf32>
    %218 = tpu.concatenate %216, %217 in 0 : vector<1x384xf32>, vector<1x384xf32> -> vector<2x384xf32>
    %cst_52 = arith.constant dense<0.000000e+00> : vector<2x384xf32>
    %219 = tpu.matmul %215, %2, %cst_52 {dimension_numbers = #tpu.dot_dimension_numbers<[1], [0], [0], [1], [0, 0, 1, 1], [], []>} : vector<2x128xf32>, vector<128x384xf32>, vector<2x384xf32> -> vector<2x384xf32>
    %220 = vector.extract_strided_slice %218 {offsets = [0, 0], sizes = [2, 128], strides = [1, 1]} : vector<2x384xf32> to vector<2x128xf32>
    %221 = vector.extract_strided_slice %219 {offsets = [0, 0], sizes = [2, 128], strides = [1, 1]} : vector<2x384xf32> to vector<2x128xf32>
    %222 = arith.addf %220, %221 : vector<2x128xf32>
    %cst_53 = arith.constant 5.000000e-01 : f32
    %223 = vector.broadcast %cst_53 : f32 to vector<2x128xf32>
    %224 = arith.mulf %223, %222 : vector<2x128xf32>
    %225 = math.tanh %224 : vector<2x128xf32>
    %cst_54 = arith.constant 5.000000e-01 : f32
    %226 = vector.broadcast %cst_54 : f32 to vector<2x128xf32>
    %227 = arith.mulf %226, %225 : vector<2x128xf32>
    %cst_55 = arith.constant 5.000000e-01 : f32
    %228 = vector.broadcast %cst_55 : f32 to vector<2x128xf32>
    %229 = arith.addf %227, %228 : vector<2x128xf32>
    %230 = vector.extract_strided_slice %218 {offsets = [0, 128], sizes = [2, 128], strides = [1, 1]} : vector<2x384xf32> to vector<2x128xf32>
    %231 = vector.extract_strided_slice %219 {offsets = [0, 128], sizes = [2, 128], strides = [1, 1]} : vector<2x384xf32> to vector<2x128xf32>
    %232 = arith.addf %230, %231 : vector<2x128xf32>
    %cst_56 = arith.constant 5.000000e-01 : f32
    %233 = vector.broadcast %cst_56 : f32 to vector<2x128xf32>
    %234 = arith.mulf %233, %232 : vector<2x128xf32>
    %235 = math.tanh %234 : vector<2x128xf32>
    %cst_57 = arith.constant 5.000000e-01 : f32
    %236 = vector.broadcast %cst_57 : f32 to vector<2x128xf32>
    %237 = arith.mulf %236, %235 : vector<2x128xf32>
    %cst_58 = arith.constant 5.000000e-01 : f32
    %238 = vector.broadcast %cst_58 : f32 to vector<2x128xf32>
    %239 = arith.addf %237, %238 : vector<2x128xf32>
    %240 = vector.extract_strided_slice %218 {offsets = [0, 256], sizes = [2, 128], strides = [1, 1]} : vector<2x384xf32> to vector<2x128xf32>
    %241 = vector.extract_strided_slice %219 {offsets = [0, 256], sizes = [2, 128], strides = [1, 1]} : vector<2x384xf32> to vector<2x128xf32>
    %242 = arith.addf %241, %8 : vector<2x128xf32>
    %243 = arith.mulf %229, %242 : vector<2x128xf32>
    %244 = arith.addf %240, %243 : vector<2x128xf32>
    %245 = math.tanh %244 : vector<2x128xf32>
    %246 = arith.subf %215, %245 : vector<2x128xf32>
    %247 = arith.mulf %239, %246 : vector<2x128xf32>
    %248 = arith.addf %245, %247 : vector<2x128xf32>
    %249 = vector.extract_strided_slice %12 {offsets = [7, 0], sizes = [1, 384], strides = [1, 1]} : vector<8x384xf32> to vector<1x384xf32>
    %250 = vector.extract_strided_slice %16 {offsets = [7, 0], sizes = [1, 384], strides = [1, 1]} : vector<8x384xf32> to vector<1x384xf32>
    %251 = tpu.concatenate %249, %250 in 0 : vector<1x384xf32>, vector<1x384xf32> -> vector<2x384xf32>
    %cst_59 = arith.constant dense<0.000000e+00> : vector<2x384xf32>
    %252 = tpu.matmul %248, %2, %cst_59 {dimension_numbers = #tpu.dot_dimension_numbers<[1], [0], [0], [1], [0, 0, 1, 1], [], []>} : vector<2x128xf32>, vector<128x384xf32>, vector<2x384xf32> -> vector<2x384xf32>
    %253 = vector.extract_strided_slice %251 {offsets = [0, 0], sizes = [2, 128], strides = [1, 1]} : vector<2x384xf32> to vector<2x128xf32>
    %254 = vector.extract_strided_slice %252 {offsets = [0, 0], sizes = [2, 128], strides = [1, 1]} : vector<2x384xf32> to vector<2x128xf32>
    %255 = arith.addf %253, %254 : vector<2x128xf32>
    %cst_60 = arith.constant 5.000000e-01 : f32
    %256 = vector.broadcast %cst_60 : f32 to vector<2x128xf32>
    %257 = arith.mulf %256, %255 : vector<2x128xf32>
    %258 = math.tanh %257 : vector<2x128xf32>
    %cst_61 = arith.constant 5.000000e-01 : f32
    %259 = vector.broadcast %cst_61 : f32 to vector<2x128xf32>
    %260 = arith.mulf %259, %258 : vector<2x128xf32>
    %cst_62 = arith.constant 5.000000e-01 : f32
    %261 = vector.broadcast %cst_62 : f32 to vector<2x128xf32>
    %262 = arith.addf %260, %261 : vector<2x128xf32>
    %263 = vector.extract_strided_slice %251 {offsets = [0, 128], sizes = [2, 128], strides = [1, 1]} : vector<2x384xf32> to vector<2x128xf32>
    %264 = vector.extract_strided_slice %252 {offsets = [0, 128], sizes = [2, 128], strides = [1, 1]} : vector<2x384xf32> to vector<2x128xf32>
    %265 = arith.addf %263, %264 : vector<2x128xf32>
    %cst_63 = arith.constant 5.000000e-01 : f32
    %266 = vector.broadcast %cst_63 : f32 to vector<2x128xf32>
    %267 = arith.mulf %266, %265 : vector<2x128xf32>
    %268 = math.tanh %267 : vector<2x128xf32>
    %cst_64 = arith.constant 5.000000e-01 : f32
    %269 = vector.broadcast %cst_64 : f32 to vector<2x128xf32>
    %270 = arith.mulf %269, %268 : vector<2x128xf32>
    %cst_65 = arith.constant 5.000000e-01 : f32
    %271 = vector.broadcast %cst_65 : f32 to vector<2x128xf32>
    %272 = arith.addf %270, %271 : vector<2x128xf32>
    %273 = vector.extract_strided_slice %251 {offsets = [0, 256], sizes = [2, 128], strides = [1, 1]} : vector<2x384xf32> to vector<2x128xf32>
    %274 = vector.extract_strided_slice %252 {offsets = [0, 256], sizes = [2, 128], strides = [1, 1]} : vector<2x384xf32> to vector<2x128xf32>
    %275 = arith.addf %274, %8 : vector<2x128xf32>
    %276 = arith.mulf %262, %275 : vector<2x128xf32>
    %277 = arith.addf %273, %276 : vector<2x128xf32>
    %278 = math.tanh %277 : vector<2x128xf32>
    %279 = arith.subf %248, %278 : vector<2x128xf32>
    %280 = arith.mulf %272, %279 : vector<2x128xf32>
    %281 = arith.addf %278, %280 : vector<2x128xf32>
    %c0_66 = arith.constant 0 : index
    %c0_67 = arith.constant 0 : index
    %282 = vector.load %arg3[%c0_66, %c0_67] : memref<129x1xf32, #tpu.memory_space<vmem>>, vector<128x1xf32>
    %c128 = arith.constant 128 : index
    %c0_68 = arith.constant 0 : index
    %283 = vector.load %arg3[%c128, %c0_68] : memref<129x1xf32, #tpu.memory_space<vmem>>, vector<1x1xf32>
    %cst_69 = arith.constant dense<0.000000e+00> : vector<2x1xf32>
    %284 = tpu.matmul %281, %282, %cst_69 {dimension_numbers = #tpu.dot_dimension_numbers<[1], [0], [0], [1], [0, 0, 1, 1], [], []>} : vector<2x128xf32>, vector<128x1xf32>, vector<2x1xf32> -> vector<2x1xf32>
    %285 = vector.broadcast %283 : vector<1x1xf32> to vector<2x1xf32>
    %286 = arith.addf %284, %285 : vector<2x1xf32>
    %c0_70 = arith.constant 0 : index
    %c0_71 = arith.constant 0 : index
    %287 = vector.load %arg4[%c0_70, %c0_71] : memref<2x1xf32, #tpu.memory_space<vmem>>, vector<2x1xf32>
    tpu.vector_store %arg4[%c0_70, %c0_71], %286 {strides = array<i32>} : memref<2x1xf32, #tpu.memory_space<vmem>>, vector<2x1xf32>,
    return
  }
}

</mosaic_0001>

<llo_original>
// kernel: gru_model_forward.1
$region0: #{gru_model_forward.1}
  #allocation0 [shape = 'u32[]', space=smem, size = 0x4, offset = 0x4, fixed_abs, tag = 'smem constant byte address 0x4 - core index']
  #allocation1 [shape = 'u32[72,128]{1,0:T(1,128)}', space=vmem, size = 0x9000, scoped, tag = 'internal scratch']
  %s0 = inlined_call_operand.vmem [shape: f32[2,8,5], index: 0, kind: input, shape index: {}]
  %s1 = inlined_call_operand.vmem [shape: f32[7,384], index: 1, kind: input, shape index: {}]
  %s2 = inlined_call_operand.hbm [shape: f32[128,384], index: 2, kind: input, shape index: {}]
  %s3 = inlined_call_operand.vmem [shape: f32[129,1], index: 3, kind: input, shape index: {}]
  %s4 = inlined_call_operand.vmem [shape: f32[2,1], index: 4, kind: output, shape index: {}]
  %s5 = sld [smem:[#allocation0]]
  $region30: #{gru_model_forward.1} parent=0
    _
  %s7 = ssub.s32 1, %s5
  %s8 = scalar_select 0, %s7, %s5
  $region1: #{gru_model_forward.1} parent=0
    #allocation2 [shape = 'u8[196608]{0}', space=vmem, size = 0x30000, scoped, tag = 'input window, operand 2, single buffered']
    #allocation3 [shape = 's32[1]{0}', space=sflag, size = 0x4, scoped, tag = 'scoped memory for gru_model_forward.1']
    %9 = vsyncpa [#allocation3], 0
    // Predicated region
    $region2: #{gru_model_forward.1} parent=1 // pred_check
      _
    $region3: #{gru_model_forward.1} parent=1 // pred_check_branch
      %11 = sbr.rel (0) target = $region5
    $region4: #{gru_model_forward.1} parent=1 // pred_region
      _
    $region5: #{gru_model_forward.1} parent=1 // pred_fallthru
      _
    // Predicated region
    $region6: #{gru_model_forward.1} parent=1 // pred_check
      _
    $region7: #{gru_model_forward.1} parent=1 // pred_check_branch
      %13 = sbr.rel (0) target = $region9
    $region8: #{gru_model_forward.1} parent=1 // pred_region
      _
    $region9: #{gru_model_forward.1} parent=1 // pred_fallthru
      _
    // Predicated region
    $region10: #{gru_model_forward.1} parent=1 // pred_check
      _
    $region11: #{gru_model_forward.1} parent=1 // pred_check_branch
      %15 = sbr.rel (0) target = $region13
    $region12: #{gru_model_forward.1} parent=1 // pred_region
      %17 = vsyncadd [#allocation3], 0
      %s18 = sshll.u32 %s2, 4
      %s19 = int_to_ptr.hbm [resolvable:$true] %s18
      %s20 = sshll.u32 [#allocation2], 4
      %s21 = int_to_ptr.vmem [resolvable:$true] %s20
      %26 = dma.hbm_to_vmem [thread:$0]  %s19, 6144, %s21, [#allocation3], 384, 384, 24
    $region13: #{gru_model_forward.1} parent=1 // pred_fallthru
      _
    // Predicated region
    $region14: #{gru_model_forward.1} parent=1 // pred_check
      _
    $region15: #{gru_model_forward.1} parent=1 // pred_check_branch
      %28 = sbr.rel (0) target = $region17
    $region16: #{gru_model_forward.1} parent=1 // pred_region
      _
    $region17: #{gru_model_forward.1} parent=1 // pred_fallthru
      _
    // Predicated region
    $region18: #{gru_model_forward.1} parent=1 // pred_check
      _
    $region19: #{gru_model_forward.1} parent=1 // pred_check_branch
      %30 = sbr.rel (0) target = $region21
    $region20: #{gru_model_forward.1} parent=1 // pred_region
      %32 = dma.done [#allocation3], 6144
    $region21: #{gru_model_forward.1} parent=1 // pred_fallthru
      _
    %v33 = vld [vmem:[%s1] sm:$0x7f]
    %v34 = vld [vmem:[%s1 + $0x8] sm:$0x7f]
    %v35 = vld [vmem:[%s1 + $0x10] sm:$0x7f]
    %v36 = vld [vmem:[#allocation2] sm:$0xff]
    %v37 = vld [vmem:[#allocation2 + $0x8] sm:$0xff]
    %v38 = vld [vmem:[#allocation2 + $0x10] sm:$0xff]
    %v39 = vld [vmem:[#allocation2 + $0x18] sm:$0xff]
    %v40 = vld [vmem:[#allocation2 + $0x20] sm:$0xff]
    %v41 = vld [vmem:[#allocation2 + $0x28] sm:$0xff]
    %v42 = vld [vmem:[#allocation2 + $0x30] sm:$0xff]
    %v43 = vld [vmem:[#allocation2 + $0x38] sm:$0xff]
    %v44 = vld [vmem:[#allocation2 + $0x40] sm:$0xff]
    %v45 = vld [vmem:[#allocation2 + $0x48] sm:$0xff]
    %v46 = vld [vmem:[#allocation2 + $0x50] sm:$0xff]
    %v47 = vld [vmem:[#allocation2 + $0x58] sm:$0xff]
    %v48 = vld [vmem:[#allocation2 + $0x60] sm:$0xff]
    %v49 = vld [vmem:[#allocation2 + $0x68] sm:$0xff]
    %v50 = vld [vmem:[#allocation2 + $0x70] sm:$0xff]
    %v51 = vld [vmem:[#allocation2 + $0x78] sm:$0xff]
    %v52 = vld [vmem:[#allocation2 + $0x80] sm:$0xff]
    %v53 = vld [vmem:[#allocation2 + $0x88] sm:$0xff]
    %v54 = vld [vmem:[#allocation2 + $0x90] sm:$0xff]
    %v55 = vld [vmem:[#allocation2 + $0x98] sm:$0xff]
    %v56 = vld [vmem:[#allocation2 + $0xa0] sm:$0xff]
    %v57 = vld [vmem:[#allocation2 + $0xa8] sm:$0xff]
    %v58 = vld [vmem:[#allocation2 + $0xb0] sm:$0xff]
    %v59 = vld [vmem:[#allocation2 + $0xb8] sm:$0xff]
    %v60 = vld [vmem:[#allocation2 + $0xc0] sm:$0xff]
    %v61 = vld [vmem:[#allocation2 + $0xc8] sm:$0xff]
    %v62 = vld [vmem:[#allocation2 + $0xd0] sm:$0xff]
    %v63 = vld [vmem:[#allocation2 + $0xd8] sm:$0xff]
    %v64 = vld [vmem:[#allocation2 + $0xe0] sm:$0xff]
    %v65 = vld [vmem:[#allocation2 + $0xe8] sm:$0xff]
    %v66 = vld [vmem:[#allocation2 + $0xf0] sm:$0xff]
    %v67 = vld [vmem:[#allocation2 + $0xf8] sm:$0xff]
    %v68 = vld [vmem:[#allocation2 + $0x100] sm:$0xff]
    %v69 = vld [vmem:[#allocation2 + $0x108] sm:$0xff]
    %v70 = vld [vmem:[#allocation2 + $0x110] sm:$0xff]
    %v71 = vld [vmem:[#allocation2 + $0x118] sm:$0xff]
    %v72 = vld [vmem:[#allocation2 + $0x120] sm:$0xff]
    %v73 = vld [vmem:[#allocation2 + $0x128] sm:$0xff]
    %v74 = vld [vmem:[#allocation2 + $0x130] sm:$0xff]
    %v75 = vld [vmem:[#allocation2 + $0x138] sm:$0xff]
    %v76 = vld [vmem:[#allocation2 + $0x140] sm:$0xff]
    %v77 = vld [vmem:[#allocation2 + $0x148] sm:$0xff]
    %v78 = vld [vmem:[#allocation2 + $0x150] sm:$0xff]
    %v79 = vld [vmem:[#allocation2 + $0x158] sm:$0xff]
    %v80 = vld [vmem:[#allocation2 + $0x160] sm:$0xff]
    %v81 = vld [vmem:[#allocation2 + $0x168] sm:$0xff]
    %v82 = vld [vmem:[#allocation2 + $0x170] sm:$0xff]
    %v83 = vld [vmem:[#allocation2 + $0x178] sm:$0xff]
    %v84 = vperm.slane %v33, 5
    %v85 = vperm.slane %v34, 5
    %v86 = vperm.slane %v35, 5
    %v87 = vperm.slane %v35, 6
    %v88 = vld [vmem:[%s0] sm:$0xff]
    %vm89 = vcmask 39936
    %v91 = vsel %vm89, %v88, 0
    %vm93 = vcmask 1044480
    %v95 = vsel %vm93, %v33, 0
    %v98 = vsel %vm93, %v34, 0
    %v101 = vsel %vm93, %v35, 0
    %103 = vmatpush.msra.mxu0 0.0
    %104 = vmatpush.msra.mxu0 0.0
    %105 = vmatpush.msra.mxu0 0.0
    %106 = vmatpush.msra.mxu0 0.0
    %107 = vmatpush.msra.mxu0 0.0
    %108 = vmatpush.msra.mxu0 0.0
    %109 = vmatpush.msra.mxu0 0.0
    %110 = vmatpush.msra.mxu0 0.0
    %111 = vmatpush.msra.mxu0 0.0
    %112 = vmatpush.msra.mxu0 0.0
    %113 = vmatpush.msra.mxu0 0.0
    %114 = vmatpush.msra.mxu0 0.0
    %115 = vmatpush.msra.mxu0 0.0
    %116 = vmatpush.msra.mxu0 0.0
    %117 = vmatpush.msra.mxu0 0.0
    %118 = vmatpush.msra.mxu0 %v95
    %119 = vmatmul.f32.gmra.mxu0 %v91
    %v120 = vpop.f32.mrf.mxu0
    %v121 = vadd.f32 %v84, %v120
    %122 = vdwg.mxu0
    %123 = vmatpush.msra.mxu0 0.0
    %124 = vmatpush.msra.mxu0 0.0
    %125 = vmatpush.msra.mxu0 0.0
    %126 = vmatpush.msra.mxu0 0.0
    %127 = vmatpush.msra.mxu0 0.0
    %128 = vmatpush.msra.mxu0 0.0
    %129 = vmatpush.msra.mxu0 0.0
    %130 = vmatpush.msra.mxu0 0.0
    %131 = vmatpush.msra.mxu0 0.0
    %132 = vmatpush.msra.mxu0 0.0
    %133 = vmatpush.msra.mxu0 0.0
    %134 = vmatpush.msra.mxu0 0.0
    %135 = vmatpush.msra.mxu0 0.0
    %136 = vmatpush.msra.mxu0 0.0
    %137 = vmatpush.msra.mxu0 0.0
    %138 = vmatpush.msra.mxu0 %v98
    %139 = vmatmul.f32.gmra.mxu0 %v91
    %v140 = vpop.f32.mrf.mxu0
    %v141 = vadd.f32 %v85, %v140
    %142 = vdwg.mxu0
    %143 = vmatpush.msra.mxu0 0.0
    %144 = vmatpush.msra.mxu0 0.0
    %145 = vmatpush.msra.mxu0 0.0
    %146 = vmatpush.msra.mxu0 0.0
    %147 = vmatpush.msra.mxu0 0.0
    %148 = vmatpush.msra.mxu0 0.0
    %149 = vmatpush.msra.mxu0 0.0
    %150 = vmatpush.msra.mxu0 0.0
    %151 = vmatpush.msra.mxu0 0.0
    %152 = vmatpush.msra.mxu0 0.0
    %153 = vmatpush.msra.mxu0 0.0
    %154 = vmatpush.msra.mxu0 0.0
    %155 = vmatpush.msra.mxu0 0.0
    %156 = vmatpush.msra.mxu0 0.0
    %157 = vmatpush.msra.mxu0 0.0
    %158 = vmatpush.msra.mxu0 %v101
    %159 = vmatmul.f32.gmra.mxu0 %v91
    %v160 = vpop.f32.mrf.mxu0
    %v161 = vadd.f32 %v86, %v160
    %162 = vdwg.mxu0
    %s163 = scalar_lea.vmem %s0, 8
    %v164 = vld [vmem:[%s163] sm:$0xff]
    %v166 = vsel %vm89, %v164, 0
    %168 = vmatpush.msra.mxu0 0.0
    %169 = vmatpush.msra.mxu0 0.0
    %170 = vmatpush.msra.mxu0 0.0
    %171 = vmatpush.msra.mxu0 0.0
    %172 = vmatpush.msra.mxu0 0.0
    %173 = vmatpush.msra.mxu0 0.0
    %174 = vmatpush.msra.mxu0 0.0
    %175 = vmatpush.msra.mxu0 0.0
    %176 = vmatpush.msra.mxu0 0.0
    %177 = vmatpush.msra.mxu0 0.0
    %178 = vmatpush.msra.mxu0 0.0
    %179 = vmatpush.msra.mxu0 0.0
    %180 = vmatpush.msra.mxu0 0.0
    %181 = vmatpush.msra.mxu0 0.0
    %182 = vmatpush.msra.mxu0 0.0
    %183 = vmatpush.msra.mxu0 %v95
    %184 = vmatmul.f32.gmra.mxu0 %v166
    %v185 = vpop.f32.mrf.mxu0
    %v186 = vadd.f32 %v84, %v185
    %187 = vdwg.mxu0
    %188 = vmatpush.msra.mxu0 0.0
    %189 = vmatpush.msra.mxu0 0.0
    %190 = vmatpush.msra.mxu0 0.0
    %191 = vmatpush.msra.mxu0 0.0
    %192 = vmatpush.msra.mxu0 0.0
    %193 = vmatpush.msra.mxu0 0.0
    %194 = vmatpush.msra.mxu0 0.0
    %195 = vmatpush.msra.mxu0 0.0
    %196 = vmatpush.msra.mxu0 0.0
    %197 = vmatpush.msra.mxu0 0.0
    %198 = vmatpush.msra.mxu0 0.0
    %199 = vmatpush.msra.mxu0 0.0
    %200 = vmatpush.msra.mxu0 0.0
    %201 = vmatpush.msra.mxu0 0.0
    %202 = vmatpush.msra.mxu0 0.0
    %203 = vmatpush.msra.mxu0 %v98
    %204 = vmatmul.f32.gmra.mxu0 %v166
    %v205 = vpop.f32.mrf.mxu0
    %v206 = vadd.f32 %v85, %v205
    %207 = vdwg.mxu0
    %208 = vmatpush.msra.mxu0 0.0
    %209 = vmatpush.msra.mxu0 0.0
    %210 = vmatpush.msra.mxu0 0.0
    %211 = vmatpush.msra.mxu0 0.0
    %212 = vmatpush.msra.mxu0 0.0
    %213 = vmatpush.msra.mxu0 0.0
    %214 = vmatpush.msra.mxu0 0.0
    %215 = vmatpush.msra.mxu0 0.0
    %216 = vmatpush.msra.mxu0 0.0
    %217 = vmatpush.msra.mxu0 0.0
    %218 = vmatpush.msra.mxu0 0.0
    %219 = vmatpush.msra.mxu0 0.0
    %220 = vmatpush.msra.mxu0 0.0
    %221 = vmatpush.msra.mxu0 0.0
    %222 = vmatpush.msra.mxu0 0.0
    %223 = vmatpush.msra.mxu0 %v101
    %224 = vmatmul.f32.gmra.mxu0 %v166
    %v225 = vpop.f32.mrf.mxu0
    %v226 = vadd.f32 %v86, %v225
    %227 = vdwg.mxu0
    %v231 = vrot.slane %v186, 7
    %v232 = vrot.slane %v206, 7
    %v233 = vrot.slane %v226, 7
    %vm237 = vcmask 1040384
    %v238 = vsel %vm237, %v121, %v231
    %v239 = vsel %vm237, %v141, %v232
    %v240 = vsel %vm237, %v161, %v233
    %241 = vmatpush.msra.mxu0 %v81
    %242 = vmatpush.msra.mxu0 %v78
    %243 = vmatpush.msra.mxu0 %v75
    %244 = vmatpush.msra.mxu0 %v72
    %245 = vmatpush.msra.mxu0 %v69
    %246 = vmatpush.msra.mxu0 %v66
    %247 = vmatpush.msra.mxu0 %v63
    %248 = vmatpush.msra.mxu0 %v60
    %249 = vmatpush.msra.mxu0 %v57
    %250 = vmatpush.msra.mxu0 %v54
    %251 = vmatpush.msra.mxu0 %v51
    %252 = vmatpush.msra.mxu0 %v48
    %253 = vmatpush.msra.mxu0 %v45
    %254 = vmatpush.msra.mxu0 %v42
    %255 = vmatpush.msra.mxu0 %v39
    %256 = vmatpush.msra.mxu0 %v36
    %257 = vmatmul.f32.gmra.mxu0 0.0
    %v258 = vpop.f32.mrf.mxu0
    %v259 = vadd.f32 0.0, %v258
    %260 = vdwg.mxu0
    %261 = vmatpush.msra.mxu0 %v82
    %262 = vmatpush.msra.mxu0 %v79
    %263 = vmatpush.msra.mxu0 %v76
    %264 = vmatpush.msra.mxu0 %v73
    %265 = vmatpush.msra.mxu0 %v70
    %266 = vmatpush.msra.mxu0 %v67
    %267 = vmatpush.msra.mxu0 %v64
    %268 = vmatpush.msra.mxu0 %v61
    %269 = vmatpush.msra.mxu0 %v58
    %270 = vmatpush.msra.mxu0 %v55
    %271 = vmatpush.msra.mxu0 %v52
    %272 = vmatpush.msra.mxu0 %v49
    %273 = vmatpush.msra.mxu0 %v46
    %274 = vmatpush.msra.mxu0 %v43
    %275 = vmatpush.msra.mxu0 %v40
    %276 = vmatpush.msra.mxu0 %v37
    %277 = vmatmul.f32.gmra.mxu0 0.0
    %v278 = vpop.f32.mrf.mxu0
    %v279 = vadd.f32 0.0, %v278
    %280 = vdwg.mxu0
    %281 = vmatpush.msra.mxu0 %v83
    %282 = vmatpush.msra.mxu0 %v80
    %283 = vmatpush.msra.mxu0 %v77
    %284 = vmatpush.msra.mxu0 %v74
    %285 = vmatpush.msra.mxu0 %v71
    %286 = vmatpush.msra.mxu0 %v68
    %287 = vmatpush.msra.mxu0 %v65
    %288 = vmatpush.msra.mxu0 %v62
    %289 = vmatpush.msra.mxu0 %v59
    %290 = vmatpush.msra.mxu0 %v56
    %291 = vmatpush.msra.mxu0 %v53
    %292 = vmatpush.msra.mxu0 %v50
    %293 = vmatpush.msra.mxu0 %v47
    %294 = vmatpush.msra.mxu0 %v44
    %295 = vmatpush.msra.mxu0 %v41
    %296 = vmatpush.msra.mxu0 %v38
    %297 = vmatmul.f32.gmra.mxu0 0.0
    %v298 = vpop.f32.mrf.mxu0
    %v299 = vadd.f32 0.0, %v298
    %300 = vdwg.mxu0
    %v301 = vadd.f32 %v238, %v259
    %v302 = vmul.f32 %v301, 0.5
    %v303 = vtanh.pop %v302
    %v304 = vmul.f32 %v303, 0.5
    %v305 = vadd.f32 %v304, 0.5
    %v306 = vadd.f32 %v239, %v279
    %v307 = vmul.f32 %v306, 0.5
    %v308 = vtanh.pop %v307
    %v309 = vmul.f32 %v308, 0.5
    %v310 = vadd.f32 %v309, 0.5
    %v311 = vadd.f32 %v299, %v87
    %v312 = vmul.f32 %v305, %v311
    %v313 = vadd.f32 %v240, %v312
    %v314 = vtanh.pop %v313
    %v315 = vsub.f32 0.0, %v314
    %v316 = vmul.f32 %v310, %v315
    %v317 = vadd.f32 %v314, %v316
    %v321 = vrot.slane %v121, 1
    %v322 = vrot.slane %v141, 1
    %v323 = vrot.slane %v161, 1
    %v327 = vsel %vm237, %v321, %v186
    %v328 = vsel %vm237, %v322, %v206
    %v329 = vsel %vm237, %v323, %v226
    %330 = vmatpush.msra.mxu0 %v81
    %331 = vmatpush.msra.mxu0 %v78
    %332 = vmatpush.msra.mxu0 %v75
    %333 = vmatpush.msra.mxu0 %v72
    %334 = vmatpush.msra.mxu0 %v69
    %335 = vmatpush.msra.mxu0 %v66
    %336 = vmatpush.msra.mxu0 %v63
    %337 = vmatpush.msra.mxu0 %v60
    %338 = vmatpush.msra.mxu0 %v57
    %339 = vmatpush.msra.mxu0 %v54
    %340 = vmatpush.msra.mxu0 %v51
    %341 = vmatpush.msra.mxu0 %v48
    %342 = vmatpush.msra.mxu0 %v45
    %343 = vmatpush.msra.mxu0 %v42
    %344 = vmatpush.msra.mxu0 %v39
    %345 = vmatpush.msra.mxu0 %v36
    %346 = vmatmul.f32.gmra.mxu0 %v317
    %v347 = vpop.f32.mrf.mxu0
    %v348 = vadd.f32 0.0, %v347
    %349 = vdwg.mxu0
    %350 = vmatpush.msra.mxu0 %v82
    %351 = vmatpush.msra.mxu0 %v79
    %352 = vmatpush.msra.mxu0 %v76
    %353 = vmatpush.msra.mxu0 %v73
    %354 = vmatpush.msra.mxu0 %v70
    %355 = vmatpush.msra.mxu0 %v67
    %356 = vmatpush.msra.mxu0 %v64
    %357 = vmatpush.msra.mxu0 %v61
    %358 = vmatpush.msra.mxu0 %v58
    %359 = vmatpush.msra.mxu0 %v55
    %360 = vmatpush.msra.mxu0 %v52
    %361 = vmatpush.msra.mxu0 %v49
    %362 = vmatpush.msra.mxu0 %v46
    %363 = vmatpush.msra.mxu0 %v43
    %364 = vmatpush.msra.mxu0 %v40
    %365 = vmatpush.msra.mxu0 %v37
    %366 = vmatmul.f32.gmra.mxu0 %v317
    %v367 = vpop.f32.mrf.mxu0
    %v368 = vadd.f32 0.0, %v367
    %369 = vdwg.mxu0
    %370 = vmatpush.msra.mxu0 %v83
    %371 = vmatpush.msra.mxu0 %v80
    %372 = vmatpush.msra.mxu0 %v77
    %373 = vmatpush.msra.mxu0 %v74
    %374 = vmatpush.msra.mxu0 %v71
    %375 = vmatpush.msra.mxu0 %v68
    %376 = vmatpush.msra.mxu0 %v65
    %377 = vmatpush.msra.mxu0 %v62
    %378 = vmatpush.msra.mxu0 %v59
    %379 = vmatpush.msra.mxu0 %v56
    %380 = vmatpush.msra.mxu0 %v53
    %381 = vmatpush.msra.mxu0 %v50
    %382 = vmatpush.msra.mxu0 %v47
    %383 = vmatpush.msra.mxu0 %v44
    %384 = vmatpush.msra.mxu0 %v41
    %385 = vmatpush.msra.mxu0 %v38
    %386 = vmatmul.f32.gmra.mxu0 %v317
    %v387 = vpop.f32.mrf.mxu0
    %v388 = vadd.f32 0.0, %v387
    %389 = vdwg.mxu0
    %v390 = vadd.f32 %v327, %v348
    %v391 = vmul.f32 %v390, 0.5
    %v392 = vtanh.pop %v391
    %v393 = vmul.f32 %v392, 0.5
    %v394 = vadd.f32 %v393, 0.5
    %v395 = vadd.f32 %v328, %v368
    %v396 = vmul.f32 %v395, 0.5
    %v397 = vtanh.pop %v396
    %v398 = vmul.f32 %v397, 0.5
    %v399 = vadd.f32 %v398, 0.5
    %v400 = vadd.f32 %v388, %v87
    %v401 = vmul.f32 %v394, %v400
    %v402 = vadd.f32 %v329, %v401
    %v403 = vtanh.pop %v402
    %v404 = vsub.f32 %v317, %v403
    %v405 = vmul.f32 %v399, %v404
    %v406 = vadd.f32 %v403, %v405
    %v407 = vrot.slane %v121, 2
    %v408 = vrot.slane %v141, 2
    %v409 = vrot.slane %v161, 2
    %v413 = vrot.slane %v186, 1
    %v414 = vrot.slane %v206, 1
    %v415 = vrot.slane %v226, 1
    %v419 = vsel %vm237, %v407, %v413
    %v420 = vsel %vm237, %v408, %v414
    %v421 = vsel %vm237, %v409, %v415
    %422 = vmatpush.msra.mxu0 %v81
    %423 = vmatpush.msra.mxu0 %v78
    %424 = vmatpush.msra.mxu0 %v75
    %425 = vmatpush.msra.mxu0 %v72
    %426 = vmatpush.msra.mxu0 %v69
    %427 = vmatpush.msra.mxu0 %v66
    %428 = vmatpush.msra.mxu0 %v63
    %429 = vmatpush.msra.mxu0 %v60
    %430 = vmatpush.msra.mxu0 %v57
    %431 = vmatpush.msra.mxu0 %v54
    %432 = vmatpush.msra.mxu0 %v51
    %433 = vmatpush.msra.mxu0 %v48
    %434 = vmatpush.msra.mxu0 %v45
    %435 = vmatpush.msra.mxu0 %v42
    %436 = vmatpush.msra.mxu0 %v39
    %437 = vmatpush.msra.mxu0 %v36
    %438 = vmatmul.f32.gmra.mxu0 %v406
    %v439 = vpop.f32.mrf.mxu0
    %v440 = vadd.f32 0.0, %v439
    %441 = vdwg.mxu0
    %442 = vmatpush.msra.mxu0 %v82
    %443 = vmatpush.msra.mxu0 %v79
    %444 = vmatpush.msra.mxu0 %v76
    %445 = vmatpush.msra.mxu0 %v73
    %446 = vmatpush.msra.mxu0 %v70
    %447 = vmatpush.msra.mxu0 %v67
    %448 = vmatpush.msra.mxu0 %v64
    %449 = vmatpush.msra.mxu0 %v61
    %450 = vmatpush.msra.mxu0 %v58
    %451 = vmatpush.msra.mxu0 %v55
    %452 = vmatpush.msra.mxu0 %v52
    %453 = vmatpush.msra.mxu0 %v49
    %454 = vmatpush.msra.mxu0 %v46
    %455 = vmatpush.msra.mxu0 %v43
    %456 = vmatpush.msra.mxu0 %v40
    %457 = vmatpush.msra.mxu0 %v37
    %458 = vmatmul.f32.gmra.mxu0 %v406
    %v459 = vpop.f32.mrf.mxu0
    %v460 = vadd.f32 0.0, %v459
    %461 = vdwg.mxu0
    %462 = vmatpush.msra.mxu0 %v83
    %463 = vmatpush.msra.mxu0 %v80
    %464 = vmatpush.msra.mxu0 %v77
    %465 = vmatpush.msra.mxu0 %v74
    %466 = vmatpush.msra.mxu0 %v71
    %467 = vmatpush.msra.mxu0 %v68
    %468 = vmatpush.msra.mxu0 %v65
    %469 = vmatpush.msra.mxu0 %v62
    %470 = vmatpush.msra.mxu0 %v59
    %471 = vmatpush.msra.mxu0 %v56
    %472 = vmatpush.msra.mxu0 %v53
    %473 = vmatpush.msra.mxu0 %v50
    %474 = vmatpush.msra.mxu0 %v47
    %475 = vmatpush.msra.mxu0 %v44
    %476 = vmatpush.msra.mxu0 %v41
    %477 = vmatpush.msra.mxu0 %v38
    %478 = vmatmul.f32.gmra.mxu0 %v406
    %v479 = vpop.f32.mrf.mxu0
    %v480 = vadd.f32 0.0, %v479
    %481 = vdwg.mxu0
    %v482 = vadd.f32 %v419, %v440
    %v483 = vmul.f32 %v482, 0.5
    %v484 = vtanh.pop %v483
    %v485 = vmul.f32 %v484, 0.5
    %v486 = vadd.f32 %v485, 0.5
    %v487 = vadd.f32 %v420, %v460
    %v488 = vmul.f32 %v487, 0.5
    %v489 = vtanh.pop %v488
    %v490 = vmul.f32 %v489, 0.5
    %v491 = vadd.f32 %v490, 0.5
    %v492 = vadd.f32 %v480, %v87
    %v493 = vmul.f32 %v486, %v492
    %v494 = vadd.f32 %v421, %v493
    %v495 = vtanh.pop %v494
    %v496 = vsub.f32 %v406, %v495
    %v497 = vmul.f32 %v491, %v496
    %v498 = vadd.f32 %v495, %v497
    %v499 = vrot.slane %v121, 3
    %v500 = vrot.slane %v141, 3
    %v501 = vrot.slane %v161, 3
    %v505 = vrot.slane %v186, 2
    %v506 = vrot.slane %v206, 2
    %v507 = vrot.slane %v226, 2
    %v511 = vsel %vm237, %v499, %v505
    %v512 = vsel %vm237, %v500, %v506
    %v513 = vsel %vm237, %v501, %v507
    %514 = vmatpush.msra.mxu0 %v81
    %515 = vmatpush.msra.mxu0 %v78
    %516 = vmatpush.msra.mxu0 %v75
    %517 = vmatpush.msra.mxu0 %v72
    %518 = vmatpush.msra.mxu0 %v69
    %519 = vmatpush.msra.mxu0 %v66
    %520 = vmatpush.msra.mxu0 %v63
    %521 = vmatpush.msra.mxu0 %v60
    %522 = vmatpush.msra.mxu0 %v57
    %523 = vmatpush.msra.mxu0 %v54
    %524 = vmatpush.msra.mxu0 %v51
    %525 = vmatpush.msra.mxu0 %v48
    %526 = vmatpush.msra.mxu0 %v45
    %527 = vmatpush.msra.mxu0 %v42
    %528 = vmatpush.msra.mxu0 %v39
    %529 = vmatpush.msra.mxu0 %v36
    %530 = vmatmul.f32.gmra.mxu0 %v498
    %v531 = vpop.f32.mrf.mxu0
    %v532 = vadd.f32 0.0, %v531
    %533 = vdwg.mxu0
    %534 = vmatpush.msra.mxu0 %v82
    %535 = vmatpush.msra.mxu0 %v79
    %536 = vmatpush.msra.mxu0 %v76
    %537 = vmatpush.msra.mxu0 %v73
    %538 = vmatpush.msra.mxu0 %v70
    %539 = vmatpush.msra.mxu0 %v67
    %540 = vmatpush.msra.mxu0 %v64
    %541 = vmatpush.msra.mxu0 %v61
    %542 = vmatpush.msra.mxu0 %v58
    %543 = vmatpush.msra.mxu0 %v55
    %544 = vmatpush.msra.mxu0 %v52
    %545 = vmatpush.msra.mxu0 %v49
    %546 = vmatpush.msra.mxu0 %v46
    %547 = vmatpush.msra.mxu0 %v43
    %548 = vmatpush.msra.mxu0 %v40
    %549 = vmatpush.msra.mxu0 %v37
    %550 = vmatmul.f32.gmra.mxu0 %v498
    %v551 = vpop.f32.mrf.mxu0
    %v552 = vadd.f32 0.0, %v551
    %553 = vdwg.mxu0
    %554 = vmatpush.msra.mxu0 %v83
    %555 = vmatpush.msra.mxu0 %v80
    %556 = vmatpush.msra.mxu0 %v77
    %557 = vmatpush.msra.mxu0 %v74
    %558 = vmatpush.msra.mxu0 %v71
    %559 = vmatpush.msra.mxu0 %v68
    %560 = vmatpush.msra.mxu0 %v65
    %561 = vmatpush.msra.mxu0 %v62
    %562 = vmatpush.msra.mxu0 %v59
    %563 = vmatpush.msra.mxu0 %v56
    %564 = vmatpush.msra.mxu0 %v53
    %565 = vmatpush.msra.mxu0 %v50
    %566 = vmatpush.msra.mxu0 %v47
    %567 = vmatpush.msra.mxu0 %v44
    %568 = vmatpush.msra.mxu0 %v41
    %569 = vmatpush.msra.mxu0 %v38
    %570 = vmatmul.f32.gmra.mxu0 %v498
    %v571 = vpop.f32.mrf.mxu0
    %v572 = vadd.f32 0.0, %v571
    %573 = vdwg.mxu0
    %v574 = vadd.f32 %v511, %v532
    %v575 = vmul.f32 %v574, 0.5
    %v576 = vtanh.pop %v575
    %v577 = vmul.f32 %v576, 0.5
    %v578 = vadd.f32 %v577, 0.5
    %v579 = vadd.f32 %v512, %v552
    %v580 = vmul.f32 %v579, 0.5
    %v581 = vtanh.pop %v580
    %v582 = vmul.f32 %v581, 0.5
    %v583 = vadd.f32 %v582, 0.5
    %v584 = vadd.f32 %v572, %v87
    %v585 = vmul.f32 %v578, %v584
    %v586 = vadd.f32 %v513, %v585
    %v587 = vtanh.pop %v586
    %v588 = vsub.f32 %v498, %v587
    %v589 = vmul.f32 %v583, %v588
    %v590 = vadd.f32 %v587, %v589
    %v591 = vrot.slane %v121, 4
    %v592 = vrot.slane %v141, 4
    %v593 = vrot.slane %v161, 4
    %v597 = vrot.slane %v186, 3
    %v598 = vrot.slane %v206, 3
    %v599 = vrot.slane %v226, 3
    %v603 = vsel %vm237, %v591, %v597
    %v604 = vsel %vm237, %v592, %v598
    %v605 = vsel %vm237, %v593, %v599
    %606 = vmatpush.msra.mxu0 %v81
    %607 = vmatpush.msra.mxu0 %v78
    %608 = vmatpush.msra.mxu0 %v75
    %609 = vmatpush.msra.mxu0 %v72
    %610 = vmatpush.msra.mxu0 %v69
    %611 = vmatpush.msra.mxu0 %v66
    %612 = vmatpush.msra.mxu0 %v63
    %613 = vmatpush.msra.mxu0 %v60
    %614 = vmatpush.msra.mxu0 %v57
    %615 = vmatpush.msra.mxu0 %v54
    %616 = vmatpush.msra.mxu0 %v51
    %617 = vmatpush.msra.mxu0 %v48
    %618 = vmatpush.msra.mxu0 %v45
    %619 = vmatpush.msra.mxu0 %v42
    %620 = vmatpush.msra.mxu0 %v39
    %621 = vmatpush.msra.mxu0 %v36
    %622 = vmatmul.f32.gmra.mxu0 %v590
    %v623 = vpop.f32.mrf.mxu0
    %v624 = vadd.f32 0.0, %v623
    %625 = vdwg.mxu0
    %626 = vmatpush.msra.mxu0 %v82
    %627 = vmatpush.msra.mxu0 %v79
    %628 = vmatpush.msra.mxu0 %v76
    %629 = vmatpush.msra.mxu0 %v73
    %630 = vmatpush.msra.mxu0 %v70
    %631 = vmatpush.msra.mxu0 %v67
    %632 = vmatpush.msra.mxu0 %v64
    %633 = vmatpush.msra.mxu0 %v61
    %634 = vmatpush.msra.mxu0 %v58
    %635 = vmatpush.msra.mxu0 %v55
    %636 = vmatpush.msra.mxu0 %v52
    %637 = vmatpush.msra.mxu0 %v49
    %638 = vmatpush.msra.mxu0 %v46
    %639 = vmatpush.msra.mxu0 %v43
    %640 = vmatpush.msra.mxu0 %v40
    %641 = vmatpush.msra.mxu0 %v37
    %642 = vmatmul.f32.gmra.mxu0 %v590
    %v643 = vpop.f32.mrf.mxu0
    %v644 = vadd.f32 0.0, %v643
    %645 = vdwg.mxu0
    %646 = vmatpush.msra.mxu0 %v83
    %647 = vmatpush.msra.mxu0 %v80
    %648 = vmatpush.msra.mxu0 %v77
    %649 = vmatpush.msra.mxu0 %v74
    %650 = vmatpush.msra.mxu0 %v71
    %651 = vmatpush.msra.mxu0 %v68
    %652 = vmatpush.msra.mxu0 %v65
    %653 = vmatpush.msra.mxu0 %v62
    %654 = vmatpush.msra.mxu0 %v59
    %655 = vmatpush.msra.mxu0 %v56
    %656 = vmatpush.msra.mxu0 %v53
    %657 = vmatpush.msra.mxu0 %v50
    %658 = vmatpush.msra.mxu0 %v47
    %659 = vmatpush.msra.mxu0 %v44
    %660 = vmatpush.msra.mxu0 %v41
    %661 = vmatpush.msra.mxu0 %v38
    %662 = vmatmul.f32.gmra.mxu0 %v590
    %v663 = vpop.f32.mrf.mxu0
    %v664 = vadd.f32 0.0, %v663
    %665 = vdwg.mxu0
    %v666 = vadd.f32 %v603, %v624
    %v667 = vmul.f32 %v666, 0.5
    %v668 = vtanh.pop %v667
    %v669 = vmul.f32 %v668, 0.5
    %v670 = vadd.f32 %v669, 0.5
    %v671 = vadd.f32 %v604, %v644
    %v672 = vmul.f32 %v671, 0.5
    %v673 = vtanh.pop %v672
    %v674 = vmul.f32 %v673, 0.5
    %v675 = vadd.f32 %v674, 0.5
    %v676 = vadd.f32 %v664, %v87
    %v677 = vmul.f32 %v670, %v676
    %v678 = vadd.f32 %v605, %v677
    %v679 = vtanh.pop %v678
    %v680 = vsub.f32 %v590, %v679
    %v681 = vmul.f32 %v675, %v680
    %v682 = vadd.f32 %v679, %v681
    %v683 = vrot.slane %v121, 5
    %v684 = vrot.slane %v141, 5
    %v685 = vrot.slane %v161, 5
    %v689 = vrot.slane %v186, 4
    %v690 = vrot.slane %v206, 4
    %v691 = vrot.slane %v226, 4
    %v695 = vsel %vm237, %v683, %v689
    %v696 = vsel %vm237, %v684, %v690
    %v697 = vsel %vm237, %v685, %v691
    %698 = vmatpush.msra.mxu0 %v81
    %699 = vmatpush.msra.mxu0 %v78
    %700 = vmatpush.msra.mxu0 %v75
    %701 = vmatpush.msra.mxu0 %v72
    %702 = vmatpush.msra.mxu0 %v69
    %703 = vmatpush.msra.mxu0 %v66
    %704 = vmatpush.msra.mxu0 %v63
    %705 = vmatpush.msra.mxu0 %v60
    %706 = vmatpush.msra.mxu0 %v57
    %707 = vmatpush.msra.mxu0 %v54
    %708 = vmatpush.msra.mxu0 %v51
    %709 = vmatpush.msra.mxu0 %v48
    %710 = vmatpush.msra.mxu0 %v45
    %711 = vmatpush.msra.mxu0 %v42
    %712 = vmatpush.msra.mxu0 %v39
    %713 = vmatpush.msra.mxu0 %v36
    %714 = vmatmul.f32.gmra.mxu0 %v682
    %v715 = vpop.f32.mrf.mxu0
    %v716 = vadd.f32 0.0, %v715
    %717 = vdwg.mxu0
    %718 = vmatpush.msra.mxu0 %v82
    %719 = vmatpush.msra.mxu0 %v79
    %720 = vmatpush.msra.mxu0 %v76
    %721 = vmatpush.msra.mxu0 %v73
    %722 = vmatpush.msra.mxu0 %v70
    %723 = vmatpush.msra.mxu0 %v67
    %724 = vmatpush.msra.mxu0 %v64
    %725 = vmatpush.msra.mxu0 %v61
    %726 = vmatpush.msra.mxu0 %v58
    %727 = vmatpush.msra.mxu0 %v55
    %728 = vmatpush.msra.mxu0 %v52
    %729 = vmatpush.msra.mxu0 %v49
    %730 = vmatpush.msra.mxu0 %v46
    %731 = vmatpush.msra.mxu0 %v43
    %732 = vmatpush.msra.mxu0 %v40
    %733 = vmatpush.msra.mxu0 %v37
    %734 = vmatmul.f32.gmra.mxu0 %v682
    %v735 = vpop.f32.mrf.mxu0
    %v736 = vadd.f32 0.0, %v735
    %737 = vdwg.mxu0
    %738 = vmatpush.msra.mxu0 %v83
    %739 = vmatpush.msra.mxu0 %v80
    %740 = vmatpush.msra.mxu0 %v77
    %741 = vmatpush.msra.mxu0 %v74
    %742 = vmatpush.msra.mxu0 %v71
    %743 = vmatpush.msra.mxu0 %v68
    %744 = vmatpush.msra.mxu0 %v65
    %745 = vmatpush.msra.mxu0 %v62
    %746 = vmatpush.msra.mxu0 %v59
    %747 = vmatpush.msra.mxu0 %v56
    %748 = vmatpush.msra.mxu0 %v53
    %749 = vmatpush.msra.mxu0 %v50
    %750 = vmatpush.msra.mxu0 %v47
    %751 = vmatpush.msra.mxu0 %v44
    %752 = vmatpush.msra.mxu0 %v41
    %753 = vmatpush.msra.mxu0 %v38
    %754 = vmatmul.f32.gmra.mxu0 %v682
    %v755 = vpop.f32.mrf.mxu0
    %v756 = vadd.f32 0.0, %v755
    %757 = vdwg.mxu0
    %v758 = vadd.f32 %v695, %v716
    %v759 = vmul.f32 %v758, 0.5
    %v760 = vtanh.pop %v759
    %v761 = vmul.f32 %v760, 0.5
    %v762 = vadd.f32 %v761, 0.5
    %v763 = vadd.f32 %v696, %v736
    %v764 = vmul.f32 %v763, 0.5
    %v765 = vtanh.pop %v764
    %v766 = vmul.f32 %v765, 0.5
    %v767 = vadd.f32 %v766, 0.5
    %v768 = vadd.f32 %v756, %v87
    %v769 = vmul.f32 %v762, %v768
    %v770 = vadd.f32 %v697, %v769
    %v771 = vtanh.pop %v770
    %v772 = vsub.f32 %v682, %v771
    %v773 = vmul.f32 %v767, %v772
    %v774 = vadd.f32 %v771, %v773
    %v775 = vrot.slane %v121, 6
    %v776 = vrot.slane %v141, 6
    %v777 = vrot.slane %v161, 6
    %v781 = vrot.slane %v186, 5
    %v782 = vrot.slane %v206, 5
    %v783 = vrot.slane %v226, 5
    %v787 = vsel %vm237, %v775, %v781
    %v788 = vsel %vm237, %v776, %v782
    %v789 = vsel %vm237, %v777, %v783
    %790 = vmatpush.msra.mxu0 %v81
    %791 = vmatpush.msra.mxu0 %v78
    %792 = vmatpush.msra.mxu0 %v75
    %793 = vmatpush.msra.mxu0 %v72
    %794 = vmatpush.msra.mxu0 %v69
    %795 = vmatpush.msra.mxu0 %v66
    %796 = vmatpush.msra.mxu0 %v63
    %797 = vmatpush.msra.mxu0 %v60
    %798 = vmatpush.msra.mxu0 %v57
    %799 = vmatpush.msra.mxu0 %v54
    %800 = vmatpush.msra.mxu0 %v51
    %801 = vmatpush.msra.mxu0 %v48
    %802 = vmatpush.msra.mxu0 %v45
    %803 = vmatpush.msra.mxu0 %v42
    %804 = vmatpush.msra.mxu0 %v39
    %805 = vmatpush.msra.mxu0 %v36
    %806 = vmatmul.f32.gmra.mxu0 %v774
    %v807 = vpop.f32.mrf.mxu0
    %v808 = vadd.f32 0.0, %v807
    %809 = vdwg.mxu0
    %810 = vmatpush.msra.mxu0 %v82
    %811 = vmatpush.msra.mxu0 %v79
    %812 = vmatpush.msra.mxu0 %v76
    %813 = vmatpush.msra.mxu0 %v73
    %814 = vmatpush.msra.mxu0 %v70
    %815 = vmatpush.msra.mxu0 %v67
    %816 = vmatpush.msra.mxu0 %v64
    %817 = vmatpush.msra.mxu0 %v61
    %818 = vmatpush.msra.mxu0 %v58
    %819 = vmatpush.msra.mxu0 %v55
    %820 = vmatpush.msra.mxu0 %v52
    %821 = vmatpush.msra.mxu0 %v49
    %822 = vmatpush.msra.mxu0 %v46
    %823 = vmatpush.msra.mxu0 %v43
    %824 = vmatpush.msra.mxu0 %v40
    %825 = vmatpush.msra.mxu0 %v37
    %826 = vmatmul.f32.gmra.mxu0 %v774
    %v827 = vpop.f32.mrf.mxu0
    %v828 = vadd.f32 0.0, %v827
    %829 = vdwg.mxu0
    %830 = vmatpush.msra.mxu0 %v83
    %831 = vmatpush.msra.mxu0 %v80
    %832 = vmatpush.msra.mxu0 %v77
    %833 = vmatpush.msra.mxu0 %v74
    %834 = vmatpush.msra.mxu0 %v71
    %835 = vmatpush.msra.mxu0 %v68
    %836 = vmatpush.msra.mxu0 %v65
    %837 = vmatpush.msra.mxu0 %v62
    %838 = vmatpush.msra.mxu0 %v59
    %839 = vmatpush.msra.mxu0 %v56
    %840 = vmatpush.msra.mxu0 %v53
    %841 = vmatpush.msra.mxu0 %v50
    %842 = vmatpush.msra.mxu0 %v47
    %843 = vmatpush.msra.mxu0 %v44
    %844 = vmatpush.msra.mxu0 %v41
    %845 = vmatpush.msra.mxu0 %v38
    %846 = vmatmul.f32.gmra.mxu0 %v774
    %v847 = vpop.f32.mrf.mxu0
    %v848 = vadd.f32 0.0, %v847
    %849 = vdwg.mxu0
    %v850 = vadd.f32 %v787, %v808
    %v851 = vmul.f32 %v850, 0.5
    %v852 = vtanh.pop %v851
    %v853 = vmul.f32 %v852, 0.5
    %v854 = vadd.f32 %v853, 0.5
    %v855 = vadd.f32 %v788, %v828
    %v856 = vmul.f32 %v855, 0.5
    %v857 = vtanh.pop %v856
    %v858 = vmul.f32 %v857, 0.5
    %v859 = vadd.f32 %v858, 0.5
    %v860 = vadd.f32 %v848, %v87
    %v861 = vmul.f32 %v854, %v860
    %v862 = vadd.f32 %v789, %v861
    %v863 = vtanh.pop %v862
    %v864 = vsub.f32 %v774, %v863
    %v865 = vmul.f32 %v859, %v864
    %v866 = vadd.f32 %v863, %v865
    %v867 = vrot.slane %v121, 7
    %v868 = vrot.slane %v141, 7
    %v869 = vrot.slane %v161, 7
    %v873 = vrot.slane %v186, 6
    %v874 = vrot.slane %v206, 6
    %v875 = vrot.slane %v226, 6
    %v879 = vsel %vm237, %v867, %v873
    %v880 = vsel %vm237, %v868, %v874
    %v881 = vsel %vm237, %v869, %v875
    %882 = vmatpush.msra.mxu0 %v81
    %883 = vmatpush.msra.mxu0 %v78
    %884 = vmatpush.msra.mxu0 %v75
    %885 = vmatpush.msra.mxu0 %v72
    %886 = vmatpush.msra.mxu0 %v69
    %887 = vmatpush.msra.mxu0 %v66
    %888 = vmatpush.msra.mxu0 %v63
    %889 = vmatpush.msra.mxu0 %v60
    %890 = vmatpush.msra.mxu0 %v57
    %891 = vmatpush.msra.mxu0 %v54
    %892 = vmatpush.msra.mxu0 %v51
    %893 = vmatpush.msra.mxu0 %v48
    %894 = vmatpush.msra.mxu0 %v45
    %895 = vmatpush.msra.mxu0 %v42
    %896 = vmatpush.msra.mxu0 %v39
    %897 = vmatpush.msra.mxu0 %v36
    %898 = vmatmul.f32.gmra.mxu0 %v866
    %v899 = vpop.f32.mrf.mxu0
    %v900 = vadd.f32 0.0, %v899
    %901 = vdwg.mxu0
    %902 = vmatpush.msra.mxu0 %v82
    %903 = vmatpush.msra.mxu0 %v79
    %904 = vmatpush.msra.mxu0 %v76
    %905 = vmatpush.msra.mxu0 %v73
    %906 = vmatpush.msra.mxu0 %v70
    %907 = vmatpush.msra.mxu0 %v67
    %908 = vmatpush.msra.mxu0 %v64
    %909 = vmatpush.msra.mxu0 %v61
    %910 = vmatpush.msra.mxu0 %v58
    %911 = vmatpush.msra.mxu0 %v55
    %912 = vmatpush.msra.mxu0 %v52
    %913 = vmatpush.msra.mxu0 %v49
    %914 = vmatpush.msra.mxu0 %v46
    %915 = vmatpush.msra.mxu0 %v43
    %916 = vmatpush.msra.mxu0 %v40
    %917 = vmatpush.msra.mxu0 %v37
    %918 = vmatmul.f32.gmra.mxu0 %v866
    %v919 = vpop.f32.mrf.mxu0
    %v920 = vadd.f32 0.0, %v919
    %921 = vdwg.mxu0
    %922 = vmatpush.msra.mxu0 %v83
    %923 = vmatpush.msra.mxu0 %v80
    %924 = vmatpush.msra.mxu0 %v77
    %925 = vmatpush.msra.mxu0 %v74
    %926 = vmatpush.msra.mxu0 %v71
    %927 = vmatpush.msra.mxu0 %v68
    %928 = vmatpush.msra.mxu0 %v65
    %929 = vmatpush.msra.mxu0 %v62
    %930 = vmatpush.msra.mxu0 %v59
    %931 = vmatpush.msra.mxu0 %v56
    %932 = vmatpush.msra.mxu0 %v53
    %933 = vmatpush.msra.mxu0 %v50
    %934 = vmatpush.msra.mxu0 %v47
    %935 = vmatpush.msra.mxu0 %v44
    %936 = vmatpush.msra.mxu0 %v41
    %937 = vmatpush.msra.mxu0 %v38
    %938 = vmatmul.f32.gmra.mxu0 %v866
    %v939 = vpop.f32.mrf.mxu0
    %v940 = vadd.f32 0.0, %v939
    %941 = vdwg.mxu0
    %v942 = vadd.f32 %v879, %v900
    %v943 = vmul.f32 %v942, 0.5
    %v944 = vtanh.pop %v943
    %v945 = vmul.f32 %v944, 0.5
    %v946 = vadd.f32 %v945, 0.5
    %v947 = vadd.f32 %v880, %v920
    %v948 = vmul.f32 %v947, 0.5
    %v949 = vtanh.pop %v948
    %v950 = vmul.f32 %v949, 0.5
    %v951 = vadd.f32 %v950, 0.5
    %v952 = vadd.f32 %v940, %v87
    %v953 = vmul.f32 %v946, %v952
    %v954 = vadd.f32 %v881, %v953
    %v955 = vtanh.pop %v954
    %v956 = vsub.f32 %v866, %v955
    %v957 = vmul.f32 %v951, %v956
    %v958 = vadd.f32 %v955, %v957
    %v959 = vld [vmem:[%s3] sm:$0xff]
    %v960 = vld [vmem:[%s3 + $0x8] sm:$0xff]
    %v961 = vld [vmem:[%s3 + $0x10] sm:$0xff]
    %v962 = vld [vmem:[%s3 + $0x18] sm:$0xff]
    %v963 = vld [vmem:[%s3 + $0x20] sm:$0xff]
    %v964 = vld [vmem:[%s3 + $0x28] sm:$0xff]
    %v965 = vld [vmem:[%s3 + $0x30] sm:$0xff]
    %v966 = vld [vmem:[%s3 + $0x38] sm:$0xff]
    %v967 = vld [vmem:[%s3 + $0x40] sm:$0xff]
    %v968 = vld [vmem:[%s3 + $0x48] sm:$0xff]
    %v969 = vld [vmem:[%s3 + $0x50] sm:$0xff]
    %v970 = vld [vmem:[%s3 + $0x58] sm:$0xff]
    %v971 = vld [vmem:[%s3 + $0x60] sm:$0xff]
    %v972 = vld [vmem:[%s3 + $0x68] sm:$0xff]
    %v973 = vld [vmem:[%s3 + $0x70] sm:$0xff]
    %v974 = vld [vmem:[%s3 + $0x78] sm:$0xff]
    %v975 = vld [vmem:[%s3 + $0x80] sm:$0x1]
    %v976 = vperm.slane %v975, 0
    %977 = vmatpush.msra.mxu0 %v974
    %978 = vmatpush.msra.mxu0 %v973
    %979 = vmatpush.msra.mxu0 %v972
    %980 = vmatpush.msra.mxu0 %v971
    %981 = vmatpush.msra.mxu0 %v970
    %982 = vmatpush.msra.mxu0 %v969
    %983 = vmatpush.msra.mxu0 %v968
    %984 = vmatpush.msra.mxu0 %v967
    %985 = vmatpush.msra.mxu0 %v966
    %986 = vmatpush.msra.mxu0 %v965
    %987 = vmatpush.msra.mxu0 %v964
    %988 = vmatpush.msra.mxu0 %v963
    %989 = vmatpush.msra.mxu0 %v962
    %990 = vmatpush.msra.mxu0 %v961
    %991 = vmatpush.msra.mxu0 %v960
    %992 = vmatpush.msra.mxu0 %v959
    %993 = vmatmul.f32.gmra.mxu0 %v958
    %v994 = vpop.f32.mrf.mxu0
    %v995 = vadd.f32 %v976, %v994
    %996 = vdwg.mxu0
    %vm997 = vcmask 1024
    %998 = vst.msk [vmem:[%s4] sm:$0x3] %vm997, %v995
    // Predicated region
    $region22: #{gru_model_forward.1} parent=1 // pred_check
      _
    $region23: #{gru_model_forward.1} parent=1 // pred_check_branch
      %1000 = sbr.rel (0) target = $region25
    $region24: #{gru_model_forward.1} parent=1 // pred_region
      _
    $region25: #{gru_model_forward.1} parent=1 // pred_fallthru
      _
    // Predicated region
    $region26: #{gru_model_forward.1} parent=1 // pred_check
      _
    $region27: #{gru_model_forward.1} parent=1 // pred_check_branch
      %1002 = sbr.rel (0) target = $region29
    $region28: #{gru_model_forward.1} parent=1 // pred_region
      _
    $region29: #{gru_model_forward.1} parent=1 // pred_fallthru
      _
    %1003 = vsyncpa [#allocation3], 1

</llo_original>
